<compile_context>
chip_gen: v7x
topology: tpu7x:2x2x1
jax: 0.10.0
libtpu: 0.0.40
codegen_flags: <defaults>
</compile_context>

<pallas_src>
import math

import jax
import jax.numpy as jnp
from jax.experimental import pallas as pl
from jax.experimental.pallas import tpu as pltpu


_GELU_C = math.sqrt(2.0 / math.pi)
_MIB = 1024 * 1024


def _new_gelu(x):
    # Exact OpenAI / Karpathy NewGELU, lightly refactored:
    #   c*(x + 0.044715*x^3) == (c*x)*(1 + 0.044715*x*x)   (one fewer VPU mul)
    # tanh runs on the EUP slot, concurrent with MXU work.
    u = (_GELU_C * x) * (1.0 + 0.044715 * (x * x))
    return 0.5 * x * (1.0 + jnp.tanh(u))


def _round_up(n, m):
    return ((n + m - 1) // m) * m


def _pick_tile_h(H, target):
    """Largest 128-aligned tile <= target that divides H (or H itself)."""
    if H <= target:
        return H
    th = (target // 128) * 128
    while th >= 128:
        if H % th == 0:
            return th
        th -= 128
    return H


def _vmem_capacity_bytes():
    """Physical VMEM capacity; conservative 64 MiB (v7x per-TC) fallback."""
    default = 64 * _MIB
    try:
        cap = int(getattr(pltpu.get_tpu_info(), "vmem_capacity_bytes", 0))
        return cap if cap > 0 else default
    except Exception:
        return default


def _make_mlp_kernel(resident, tile_h, acc_in_out):
    """Kernel over grid (M tiles, H tiles); axis 1 is the hidden reduction."""

    def kernel(x_ref, wfc_ref, bfc_ref, wproj_ref, bproj_ref, o_ref, *scratch):
        acc_ref = o_ref if acc_in_out else scratch[0]
        j = pl.program_id(1)

        @pl.when(j == 0)
        def _():
            # Fold the c_proj bias into the accumulator init.
            acc_ref[...] = jnp.broadcast_to(
                bproj_ref[...].astype(jnp.float32), acc_ref.shape)

        if resident:
            # Weights live fully in VMEM; slice the current (tile_h) slab.
            off = pl.multiple_of(j * tile_h, tile_h)
            wfc = wfc_ref[:, pl.ds(off, tile_h)]
            bfc = bfc_ref[:, pl.ds(off, tile_h)]
            wproj = wproj_ref[pl.ds(off, tile_h), :]
        else:
            wfc = wfc_ref[...]
            bfc = bfc_ref[...]
            wproj = wproj_ref[...]

        # c_fc slice: (tile_m, C) @ (C, tile_h) on the MXU, f32 accumulation.
        h = jnp.dot(x_ref[...], wfc, preferred_element_type=jnp.float32)
        h = _new_gelu(h + bfc.astype(jnp.float32))

        # Partial c_proj: (tile_m, tile_h) @ (tile_h, C), accumulated in f32.
        acc_ref[...] += jnp.dot(h.astype(wproj.dtype), wproj,
                                preferred_element_type=jnp.float32)

        if not acc_in_out:
            @pl.when(j == pl.num_programs(1) - 1)
            def _():
                o_ref[...] = acc_ref[...].astype(o_ref.dtype)

    return kernel


def mlp_forward(x, w_fc, b_fc, w_proj, b_proj, *,
                tile_m=1024, tile_h=1024,
                compute_dtype=jnp.bfloat16, out_dtype=None):
    """GPT-2 MLP forward.

    x:      (B, T, C)
    w_fc:   (C, 4C)   stored (in, out), i.e. transposed vs torch Linear.weight
    b_fc:   (4C,)
    w_proj: (4C, C)
    b_proj: (C,)
    Weights should be stored in `compute_dtype` (bf16) so no per-call cast
    is emitted.
    """
    B, T, C = x.shape
    H = w_fc.shape[1]
    M = B * T
    cdt = jnp.dtype(compute_dtype)
    out_dtype = jnp.dtype(x.dtype if out_dtype is None else out_dtype)
    need_scratch = out_dtype != jnp.dtype(jnp.float32)

    # --- tile selection: 8-sublane / 128-lane aligned --------------------
    tile_h = _pick_tile_h(H, tile_h)
    tile_m = min(tile_m, _round_up(M, 8))
    tile_m = _round_up(tile_m, 8)
    # Ensure >=2 M tiles when possible so the "parallel" axis can shard across
    # both v7x TensorCores (harmless single extra grid step on 1-TC parts).
    if _round_up(M, tile_m) // tile_m == 1 and M > 8:
        tile_m = _round_up((M + 1) // 2, 8)

    # --- VMEM budgeting (generation aware) --------------------------------
    capacity = _vmem_capacity_bytes()
    vmem_budget = (capacity * 7) // 8   # ~112 MiB on 128 MiB parts, ~56 MiB on v7x

    def footprint(resident_weights, tm, th):
        f = 2 * tm * C * cdt.itemsize                  # x blocks (double buffered)
        f += 2 * tm * C * out_dtype.itemsize           # out blocks
        if resident_weights:
            f += 2 * (C * H + H * C) * cdt.itemsize    # full weights
            f += 2 * H * 4                             # b_fc (f32)
        else:
            f += 2 * (C * th + th * C) * cdt.itemsize  # weight tiles
            f += 2 * th * 4
        f += 2 * C * 4                                 # b_proj (f32)
        if need_scratch:
            f += tm * C * 4
        return f

    # Shrink tile_m if even the streamed footprint does not fit.
    while footprint(False, tile_m, tile_h) > vmem_budget and tile_m > 64:
        tile_m = _round_up(tile_m // 2, 8)

    Mp = _round_up(M, tile_m)
    n_m = Mp // tile_m
    n_h = H // tile_h

    # Weight residency only pays when weights would otherwise be streamed more
    # than once (n_m > 1) and the full weights fit the VMEM budget.
    resident = n_m > 1 and (footprint(True, tile_m, tile_h) + 4 * _MIB) <= vmem_budget
    vmem_limit = int(vmem_budget)

    # --- prepare operands ---------------------------------------------------
    x2d = x.reshape(M, C)
    if Mp != M:
        x2d = jnp.pad(x2d, ((0, Mp - M), (0, 0)))
    x2d = x2d.astype(cdt)

    # No-op if the caller already stores weights in compute_dtype (recommended).
    w_fc_c = w_fc if w_fc.dtype == cdt else w_fc.astype(cdt)
    w_proj_c = w_proj if w_proj.dtype == cdt else w_proj.astype(cdt)
    bfc2d = b_fc.reshape(1, H).astype(jnp.float32)
    bproj2d = b_proj.reshape(1, C).astype(jnp.float32)

    # --- BlockSpecs ---------------------------------------------------------
    x_spec = pl.BlockSpec((tile_m, C), lambda i, j: (i, 0))
    if resident:
        wfc_spec = pl.BlockSpec((C, H), lambda i, j: (0, 0))
        bfc_spec = pl.BlockSpec((1, H), lambda i, j: (0, 0))
        wproj_spec = pl.BlockSpec((H, C), lambda i, j: (0, 0))
    else:
        wfc_spec = pl.BlockSpec((C, tile_h), lambda i, j: (0, j))
        bfc_spec = pl.BlockSpec((1, tile_h), lambda i, j: (0, j))
        wproj_spec = pl.BlockSpec((tile_h, C), lambda i, j: (j, 0))
    bproj_spec = pl.BlockSpec((1, C), lambda i, j: (0, 0))
    out_spec = pl.BlockSpec((tile_m, C), lambda i, j: (i, 0))

    scratch_shapes = (
        [pltpu.VMEM((tile_m, C), jnp.float32)] if need_scratch else [])

    # --- cost estimate (actual traffic) --------------------------------------
    w_fetches = 1 if resident else n_m
    bytes_accessed = (
        Mp * C * cdt.itemsize                              # x read
        + w_fetches * (C * H + H * C) * cdt.itemsize       # weights
        + w_fetches * H * 4 + C * 4                        # biases
        + Mp * C * out_dtype.itemsize)                     # output write
    cost = pl.CostEstimate(
        flops=4 * Mp * C * H,          # two matmuls, 2*M*C*H each
        transcendentals=Mp * H,        # one tanh per hidden activation
        bytes_accessed=bytes_accessed)

    kernel = _make_mlp_kernel(resident, tile_h, not need_scratch)

    out2d = pl.pallas_call(
        kernel,
        out_shape=jax.ShapeDtypeStruct((Mp, C), out_dtype),
        grid_spec=pltpu.PrefetchScalarGridSpec(
            num_scalar_prefetch=0,
            grid=(n_m, n_h),
            in_specs=[x_spec, wfc_spec, bfc_spec, wproj_spec, bproj_spec],
            out_specs=out_spec,
            scratch_shapes=scratch_shapes),
        compiler_params=pltpu.CompilerParams(
            dimension_semantics=("parallel", "arbitrary"),
            vmem_limit_bytes=vmem_limit),
        cost_estimate=cost,
    )(x2d, w_fc_c, bfc2d, w_proj_c, bproj2d)

    return out2d[:M].reshape(B, T, C)


def mlp_reference(x, w_fc, b_fc, w_proj, b_proj):
    w_fc = w_fc.astype(jnp.float32)
    w_proj = w_proj.astype(jnp.float32)
    h = jnp.einsum("btc,ch->bth", x, w_fc) + b_fc.astype(jnp.float32)
    h = _new_gelu(h)
    return jnp.einsum("bth,hc->btc", h, w_proj) + b_proj.astype(jnp.float32)


if __name__ == "__main__":
    # Small GPT-2-ish config: batch=2, seq=8, n_embd=32 -> hidden=128
    B, T, C = 2, 8, 32
    H = 4 * C

    key = jax.random.PRNGKey(0)
    kx, k1, k2, k3, k4 = jax.random.split(key, 5)

    x = jax.random.normal(kx, (B, T, C), dtype=jnp.float32)

    # Deterministic init mirroring nn.Linear's U(-1/sqrt(fan_in), 1/sqrt(fan_in)).
    bound_fc = 1.0 / math.sqrt(C)
    w_fc = jax.random.uniform(k1, (C, H), jnp.float32, -bound_fc, bound_fc)
    b_fc = jax.random.uniform(k2, (H,), jnp.float32, -bound_fc, bound_fc)

    bound_pr = 1.0 / math.sqrt(H)
    w_proj = jax.random.uniform(k3, (H, C), jnp.float32, -bound_pr, bound_pr)
    b_proj = jax.random.uniform(k4, (C,), jnp.float32, -bound_pr, bound_pr)

    # Store MXU weights in bf16 once at init (no per-call cast in the wrapper).
    w_fc_bf16 = w_fc.astype(jnp.bfloat16)
    w_proj_bf16 = w_proj.astype(jnp.bfloat16)

    out = mlp_forward(x, w_fc_bf16, b_fc, w_proj_bf16, b_proj)
    out = jax.block_until_ready(out)

    ref = mlp_reference(x, w_fc_bf16, b_fc, w_proj_bf16, b_proj)
    assert out.shape == (B, T, C)
    # bf16 MXU inputs with f32 accumulation -> looser tolerance than pure f32.
    max_err = float(jnp.max(jnp.abs(out - ref)))
    assert jnp.allclose(out, ref, atol=2e-2, rtol=2e-2), max_err

    print("KERNEL_OK")
</pallas_src>

<mosaic_0001>
module attributes {stable_mosaic.version = 11 : i64} {
  func.func @kernel(%arg0: i32, %arg1: i32, %arg2: memref<8x32xbf16, #tpu.memory_space<vmem>>, %arg3: memref<32x128xbf16, #tpu.memory_space<vmem>>, %arg4: memref<1x128xf32, #tpu.memory_space<vmem>>, %arg5: memref<128x32xbf16, #tpu.memory_space<vmem>>, %arg6: memref<1x32xf32, #tpu.memory_space<vmem>>, %arg7: memref<8x32xf32, #tpu.memory_space<vmem>>) attributes {dimension_semantics = [#tpu.dimension_semantics<parallel>, #tpu.dimension_semantics<arbitrary>], iteration_bounds = array<i64: 2, 1>, scalar_prefetch = 0 : i64, scratch_operands = 0 : i64, tpu.core_type = #tpu.core_type<tc>, window_params = [{transform_indices = @transform_0, window_bounds = array<i64: 8, 32>}, {pipeline_mode = #tpu.pipeline_mode<synchronous>, transform_indices = @transform_1, window_bounds = array<i64: 32, 128>}, {pipeline_mode = #tpu.pipeline_mode<synchronous>, transform_indices = @transform_2, window_bounds = array<i64: 1, 128>}, {pipeline_mode = #tpu.pipeline_mode<synchronous>, transform_indices = @transform_3, window_bounds = array<i64: 128, 32>}, {pipeline_mode = #tpu.pipeline_mode<synchronous>, transform_indices = @transform_4, window_bounds = array<i64: 1, 32>}, {transform_indices = @transform_5, window_bounds = array<i64: 8, 32>}]} {
    %c0_i32 = arith.constant 0 : i32
    %0 = arith.cmpi eq, %arg1, %c0_i32 : i32
    %1 = arith.extui %0 : i1 to i32
    %c0_i32_0 = arith.constant 0 : i32
    %2 = arith.cmpi ne, %1, %c0_i32_0 : i32
    scf.if %2 {
      %c0_15 = arith.constant 0 : index
      %c0_16 = arith.constant 0 : index
      %34 = vector.load %arg6[%c0_15, %c0_16] : memref<1x32xf32, #tpu.memory_space<vmem>>, vector<1x32xf32>
      %35 = vector.shape_cast %34 : vector<1x32xf32> to vector<1x32xf32>
      %36 = vector.broadcast %35 : vector<1x32xf32> to vector<8x32xf32>
      %c0_17 = arith.constant 0 : index
      %c0_18 = arith.constant 0 : index
      %37 = vector.load %arg7[%c0_17, %c0_18] : memref<8x32xf32, #tpu.memory_space<vmem>>, vector<8x32xf32>
      tpu.vector_store %arg7[%c0_17, %c0_18], %36 {strides = array<i32>} : memref<8x32xf32, #tpu.memory_space<vmem>>, vector<8x32xf32>,
    } else {
    }
    %c128_i32 = arith.constant 128 : i32
    %3 = arith.muli %arg1, %c128_i32 : i32
    %4 = tpu.assume_multiple %3, 128 : i32
    %c0 = arith.constant 0 : index
    %5 = arith.index_cast %4 : i32 to index
    %6 = vector.load %arg3[%c0, %5] : memref<32x128xbf16, #tpu.memory_space<vmem>>, vector<32x128xbf16>
    %c0_1 = arith.constant 0 : index
    %7 = arith.index_cast %4 : i32 to index
    %8 = vector.load %arg4[%c0_1, %7] : memref<1x128xf32, #tpu.memory_space<vmem>>, vector<1x128xf32>
    %9 = arith.index_cast %4 : i32 to index
    %c0_2 = arith.constant 0 : index
    %10 = vector.load %arg5[%9, %c0_2] : memref<128x32xbf16, #tpu.memory_space<vmem>>, vector<128x32xbf16>
    %c0_3 = arith.constant 0 : index
    %c0_4 = arith.constant 0 : index
    %11 = vector.load %arg2[%c0_3, %c0_4] : memref<8x32xbf16, #tpu.memory_space<vmem>>, vector<8x32xbf16>
    %cst = arith.constant dense<0.000000e+00> : vector<8x128xf32>
    %12 = tpu.matmul %11, %6, %cst {dimension_numbers = #tpu.dot_dimension_numbers<[1], [0], [0], [1], [0, 0, 1, 1], [], []>} : vector<8x32xbf16>, vector<32x128xbf16>, vector<8x128xf32> -> vector<8x128xf32>
    %13 = vector.broadcast %8 : vector<1x128xf32> to vector<8x128xf32>
    %14 = arith.addf %12, %13 : vector<8x128xf32>
    %cst_5 = arith.constant 0.797884583 : f32
    %15 = vector.broadcast %cst_5 : f32 to vector<8x128xf32>
    %16 = arith.mulf %15, %14 : vector<8x128xf32>
    %17 = arith.mulf %14, %14 : vector<8x128xf32>
    %cst_6 = arith.constant 4.471500e-02 : f32
    %18 = vector.broadcast %cst_6 : f32 to vector<8x128xf32>
    %19 = arith.mulf %18, %17 : vector<8x128xf32>
    %cst_7 = arith.constant 1.000000e+00 : f32
    %20 = vector.broadcast %cst_7 : f32 to vector<8x128xf32>
    %21 = arith.addf %20, %19 : vector<8x128xf32>
    %22 = arith.mulf %16, %21 : vector<8x128xf32>
    %cst_8 = arith.constant 5.000000e-01 : f32
    %23 = vector.broadcast %cst_8 : f32 to vector<8x128xf32>
    %24 = arith.mulf %23, %14 : vector<8x128xf32>
    %25 = math.tanh %22 : vector<8x128xf32>
    %cst_9 = arith.constant 1.000000e+00 : f32
    %26 = vector.broadcast %cst_9 : f32 to vector<8x128xf32>
    %27 = arith.addf %26, %25 : vector<8x128xf32>
    %28 = arith.mulf %24, %27 : vector<8x128xf32>
    %c0_10 = arith.constant 0 : index
    %c0_11 = arith.constant 0 : index
    %29 = vector.load %arg7[%c0_10, %c0_11] : memref<8x32xf32, #tpu.memory_space<vmem>>, vector<8x32xf32>
    %30 = arith.truncf %28 : vector<8x128xf32> to vector<8x128xbf16>
    %cst_12 = arith.constant dense<0.000000e+00> : vector<8x32xf32>
    %31 = tpu.matmul %30, %10, %cst_12 {dimension_numbers = #tpu.dot_dimension_numbers<[1], [0], [0], [1], [0, 0, 1, 1], [], []>} : vector<8x128xbf16>, vector<128x32xbf16>, vector<8x32xf32> -> vector<8x32xf32>
    %32 = arith.addf %29, %31 : vector<8x32xf32>
    %c0_13 = arith.constant 0 : index
    %c0_14 = arith.constant 0 : index
    %33 = vector.load %arg7[%c0_13, %c0_14] : memref<8x32xf32, #tpu.memory_space<vmem>>, vector<8x32xf32>
    tpu.vector_store %arg7[%c0_13, %c0_14], %32 {strides = array<i32>} : memref<8x32xf32, #tpu.memory_space<vmem>>, vector<8x32xf32>,
    return
  }
  func.func @transform_0(%arg0: i32, %arg1: i32) -> (i32, i32) {
    %c0_i32 = arith.constant 0 : i32
    %c0_i32_0 = arith.constant 0 : i32
    return %arg0, %c0_i32 : i32, i32
  }
  func.func @transform_1(%arg0: i32, %arg1: i32) -> (i32, i32) {
    %c0_i32 = arith.constant 0 : i32
    %c0_i32_0 = arith.constant 0 : i32
    %c0_i32_1 = arith.constant 0 : i32
    return %c0_i32, %c0_i32_0 : i32, i32
  }
  func.func @transform_2(%arg0: i32, %arg1: i32) -> (i32, i32) {
    %c0_i32 = arith.constant 0 : i32
    %c0_i32_0 = arith.constant 0 : i32
    %c0_i32_1 = arith.constant 0 : i32
    return %c0_i32, %c0_i32_0 : i32, i32
  }
  func.func @transform_3(%arg0: i32, %arg1: i32) -> (i32, i32) {
    %c0_i32 = arith.constant 0 : i32
    %c0_i32_0 = arith.constant 0 : i32
    %c0_i32_1 = arith.constant 0 : i32
    return %c0_i32, %c0_i32_0 : i32, i32
  }
  func.func @transform_4(%arg0: i32, %arg1: i32) -> (i32, i32) {
    %c0_i32 = arith.constant 0 : i32
    %c0_i32_0 = arith.constant 0 : i32
    %c0_i32_1 = arith.constant 0 : i32
    return %c0_i32, %c0_i32_0 : i32, i32
  }
  func.func @transform_5(%arg0: i32, %arg1: i32) -> (i32, i32) {
    %c0_i32 = arith.constant 0 : i32
    %c0_i32_0 = arith.constant 0 : i32
    return %arg0, %c0_i32 : i32, i32
  }
}

</mosaic_0001>

<llo_original>
// kernel: tpu_custom_call.1
$region0: #{tpu_custom_call.1}
  #allocation0 [shape = 'u32[]', space=smem, size = 0x4, offset = 0x4, fixed_abs, tag = 'smem constant byte address 0x4 - core index']
  #allocation1 [shape = 'u32[144,128]{1,0:T(1,128)}', space=vmem, size = 0x12000, scoped, tag = 'internal scratch']
  %s0 = inlined_call_operand.vmem [shape: bf16[16,32], index: 0, kind: input, shape index: {}]
  %s1 = inlined_call_operand.vmem [shape: bf16[32,128], index: 1, kind: input, shape index: {}]
  %s2 = inlined_call_operand.vmem [shape: f32[1,128], index: 2, kind: input, shape index: {}]
  %s3 = inlined_call_operand.vmem [shape: bf16[128,32], index: 3, kind: input, shape index: {}]
  %s4 = inlined_call_operand.vmem [shape: f32[1,32], index: 4, kind: input, shape index: {}]
  %s5 = inlined_call_operand.hbm [shape: f32[16,32], index: 5, kind: output, shape index: {}]
  %s6 = sld [smem:[#allocation0]]
  $region57: #{tpu_custom_call.1} parent=0
    _
  %s8 = ssub.s32 1, %s6
  %s9 = scalar_select 0, %s8, %s6
  $region1: #{tpu_custom_call.1} parent=0
    #allocation2 [shape = 'u8[8192]{0}', space=vmem, size = 0x2000, scoped, tag = 'output window, operand 0']
    #allocation3 [shape = 's32[2]{0}', space=sflag, size = 0x8, scoped, tag = 'scoped memory for tpu_custom_call.1']
    %10 = vsyncpa [#allocation3], 0
    %s11 = scalar_lea.sflag [#allocation3], 1
    %12 = vsyncpa %s11, 0
    loop: start=0, step=1, limit=4
    $region2: #{tpu_custom_call.1} parent=1 // loop_pre_header
      _
    $region3: #{tpu_custom_call.1} parent=1 // loop_header
      %s14 = sphi 0, %s18
      %p15 = scmp.ge.s32.totalorder %s14, 4
      %s21 = sphi 0, %s33
      %s22 = sphi 0, %s29
      %s23 = sphi 0, %s21
      %s24 = sphi 0, %s22
      %s25 = sphi 0, %s23
      %s26 = sphi 0, %s24
      %s36 = sphi 0, %s38
      %s39 = sphi 0, %s36
      %s40 = sphi 0, %s39
      %s56 = sphi 0, %s40
      %s60 = sphi 0, %s60
      %s62 = sphi 0, %s60
      %s63 = sphi 0, %s62
      %s77 = sphi 0, %s63
      %s81 = sphi 0, %s81
      %s83 = sphi 0, %s81
      %s84 = sphi 0, %s83
      %s98 = sphi 0, %s84
      %s102 = sphi 0, %s102
      %s104 = sphi 0, %s102
      %s105 = sphi 0, %s104
      %s119 = sphi 0, %s105
      %s123 = sphi 0, %s123
      %s125 = sphi 0, %s123
      %s126 = sphi 0, %s125
      %s140 = sphi 0, %s126
      %s146 = sphi 0, %s148
      %s149 = sphi 0, %s146
      %s150 = sphi 0, %s149
      %s166 = sphi 0, %s150
    $region4: #{tpu_custom_call.1} parent=1 // loop_header_branch
      %17 = sbr.rel (%p15) target = $region8
    $region5: #{tpu_custom_call.1} parent=1 // loop_body
      %s19 = ssub.s32 %s14, 1
      %s20 = ssub.s32 %s14, 2
      %s27 = sadd.s32 1, %s22
      %p28 = scmp.ge.s32.totalorder %s27, 1
      %s29 = scalar_select %p28, 0, %s27
      %s30 = sadd.s32 1, %s21
      %s31 = scalar_select %p28, %s30, %s21
      %p32 = scmp.ge.s32.totalorder %s31, 2
      %s33 = scalar_select %p32, 0, %s31
      %s34 = ssub.s32 %s21, %s33
      %p35 = scmp.eq.s32.totalorder %s34, 0
      %s37 = sadd.s32 %s36, 1
      %s38 = scalar_select %p35, %s36, %s37
      %p41 = pneg %p35
      %p42 = scmp.eq.s32.totalorder %s14, 1
      %p43 = por %p41, %p42
      %p44 = scmp.ne.s32.totalorder %s36, %s39
      %p45 = scmp.eq.s32.totalorder %s14, 0
      %p46 = por %p44, %p45
      %p47 = scmp.ne.s32.totalorder %s36, %s39
      %p48 = scmp.eq.s32.totalorder %s19, 1
      %p49 = por %p47, %p48
      %p50 = scmp.ne.s32.totalorder %s39, %s40
      %p51 = scmp.eq.s32.totalorder %s19, 0
      %p52 = por %p50, %p51
      %p53 = scmp.ne.s32.totalorder %s39, %s40
      %p54 = scmp.eq.s32.totalorder %s20, 1
      %p55 = por %p53, %p54
      %p57 = scmp.ne.s32.totalorder %s40, %s56
      %p58 = scmp.eq.s32.totalorder %s20, 0
      %p59 = por %p57, %p58
      %s61 = sadd.s32 %s60, 1
      %p64 = scmp.eq.s32.totalorder %s14, 1
      %p65 = scmp.ne.s32.totalorder %s60, %s62
      %p66 = scmp.eq.s32.totalorder %s14, 0
      %p67 = por %p65, %p66
      %p68 = scmp.ne.s32.totalorder %s60, %s62
      %p69 = scmp.eq.s32.totalorder %s19, 1
      %p70 = por %p68, %p69
      %p71 = scmp.ne.s32.totalorder %s62, %s63
      %p72 = scmp.eq.s32.totalorder %s19, 0
      %p73 = por %p71, %p72
      %p74 = scmp.ne.s32.totalorder %s62, %s63
      %p75 = scmp.eq.s32.totalorder %s20, 1
      %p76 = por %p74, %p75
      %p78 = scmp.ne.s32.totalorder %s63, %s77
      %p79 = scmp.eq.s32.totalorder %s20, 0
      %p80 = por %p78, %p79
      %s82 = sadd.s32 %s81, 1
      %p85 = scmp.eq.s32.totalorder %s14, 1
      %p86 = scmp.ne.s32.totalorder %s81, %s83
      %p87 = scmp.eq.s32.totalorder %s14, 0
      %p88 = por %p86, %p87
      %p89 = scmp.ne.s32.totalorder %s81, %s83
      %p90 = scmp.eq.s32.totalorder %s19, 1
      %p91 = por %p89, %p90
      %p92 = scmp.ne.s32.totalorder %s83, %s84
      %p93 = scmp.eq.s32.totalorder %s19, 0
      %p94 = por %p92, %p93
      %p95 = scmp.ne.s32.totalorder %s83, %s84
      %p96 = scmp.eq.s32.totalorder %s20, 1
      %p97 = por %p95, %p96
      %p99 = scmp.ne.s32.totalorder %s84, %s98
      %p100 = scmp.eq.s32.totalorder %s20, 0
      %p101 = por %p99, %p100
      %s103 = sadd.s32 %s102, 1
      %p106 = scmp.eq.s32.totalorder %s14, 1
      %p107 = scmp.ne.s32.totalorder %s102, %s104
      %p108 = scmp.eq.s32.totalorder %s14, 0
      %p109 = por %p107, %p108
      %p110 = scmp.ne.s32.totalorder %s102, %s104
      %p111 = scmp.eq.s32.totalorder %s19, 1
      %p112 = por %p110, %p111
      %p113 = scmp.ne.s32.totalorder %s104, %s105
      %p114 = scmp.eq.s32.totalorder %s19, 0
      %p115 = por %p113, %p114
      %p116 = scmp.ne.s32.totalorder %s104, %s105
      %p117 = scmp.eq.s32.totalorder %s20, 1
      %p118 = por %p116, %p117
      %p120 = scmp.ne.s32.totalorder %s105, %s119
      %p121 = scmp.eq.s32.totalorder %s20, 0
      %p122 = por %p120, %p121
      %s124 = sadd.s32 %s123, 1
      %p127 = scmp.eq.s32.totalorder %s14, 1
      %p128 = scmp.ne.s32.totalorder %s123, %s125
      %p129 = scmp.eq.s32.totalorder %s14, 0
      %p130 = por %p128, %p129
      %p131 = scmp.ne.s32.totalorder %s123, %s125
      %p132 = scmp.eq.s32.totalorder %s19, 1
      %p133 = por %p131, %p132
      %p134 = scmp.ne.s32.totalorder %s125, %s126
      %p135 = scmp.eq.s32.totalorder %s19, 0
      %p136 = por %p134, %p135
      %p137 = scmp.ne.s32.totalorder %s125, %s126
      %p138 = scmp.eq.s32.totalorder %s20, 1
      %p139 = por %p137, %p138
      %p141 = scmp.ne.s32.totalorder %s126, %s140
      %p142 = scmp.eq.s32.totalorder %s20, 0
      %p143 = por %p141, %p142
      %s144 = ssub.s32 %s21, %s33
      %p145 = scmp.eq.s32.totalorder %s144, 0
      %s147 = sadd.s32 %s146, 1
      %s148 = scalar_select %p145, %s146, %s147
      %p151 = pneg %p145
      %p152 = scmp.eq.s32.totalorder %s14, 1
      %p153 = por %p151, %p152
      %p154 = scmp.ne.s32.totalorder %s146, %s149
      %p155 = scmp.eq.s32.totalorder %s14, 0
      %p156 = por %p154, %p155
      %p157 = scmp.ne.s32.totalorder %s146, %s149
      %p158 = scmp.eq.s32.totalorder %s19, 1
      %p159 = por %p157, %p158
      %p160 = scmp.ne.s32.totalorder %s149, %s150
      %p161 = scmp.eq.s32.totalorder %s19, 0
      %p162 = por %p160, %p161
      %p163 = scmp.ne.s32.totalorder %s149, %s150
      %p164 = scmp.eq.s32.totalorder %s20, 1
      %p165 = por %p163, %p164
      %p167 = scmp.ne.s32.totalorder %s150, %s166
      %p168 = scmp.eq.s32.totalorder %s20, 0
      %p169 = por %p167, %p168
      %p170 = scmp.le.s32.totalorder 1, %s14
      %p171 = scmp.lt.s32.totalorder %s14, 3
      %p172 = pnand %p170, %p171
      %p173 = pneg %p172
      // Predicated region
      $region9: #{tpu_custom_call.1} parent=5 // pred_check
        _
      $region10: #{tpu_custom_call.1} parent=5 // pred_check_branch
        %175 = sbr.rel (%p172) target = $region12
      $region11: #{tpu_custom_call.1} parent=5 // pred_region
        %s176 = ssub.s32 %s14, 1
        // Predicated region
        $region13: #{tpu_custom_call.1} parent=11 // pred_check
          %p177 = pneg %p73
        $region14: #{tpu_custom_call.1} parent=11 // pred_check_branch
          %179 = sbr.rel (%p177) target = $region16
        $region15: #{tpu_custom_call.1} parent=11 // pred_region
          _
        $region16: #{tpu_custom_call.1} parent=11 // pred_fallthru
          _
        // Predicated region
        $region17: #{tpu_custom_call.1} parent=11 // pred_check
          %p180 = pneg %p94
        $region18: #{tpu_custom_call.1} parent=11 // pred_check_branch
          %182 = sbr.rel (%p180) target = $region20
        $region19: #{tpu_custom_call.1} parent=11 // pred_region
          _
        $region20: #{tpu_custom_call.1} parent=11 // pred_fallthru
          _
        // Predicated region
        $region21: #{tpu_custom_call.1} parent=11 // pred_check
          %p183 = pneg %p115
        $region22: #{tpu_custom_call.1} parent=11 // pred_check_branch
          %185 = sbr.rel (%p183) target = $region24
        $region23: #{tpu_custom_call.1} parent=11 // pred_region
          _
        $region24: #{tpu_custom_call.1} parent=11 // pred_fallthru
          _
        // Predicated region
        $region25: #{tpu_custom_call.1} parent=11 // pred_check
          %p186 = pneg %p136
        $region26: #{tpu_custom_call.1} parent=11 // pred_check_branch
          %188 = sbr.rel (%p186) target = $region28
        $region27: #{tpu_custom_call.1} parent=11 // pred_region
          _
        $region28: #{tpu_custom_call.1} parent=11 // pred_fallthru
          _
      $region12: #{tpu_custom_call.1} parent=5 // pred_fallthru
        _
      %p189 = scmp.lt.s32.totalorder %s14, 2
      // Predicated region
      $region29: #{tpu_custom_call.1} parent=5 // pred_check
        %p190 = pneg %p189
      $region30: #{tpu_custom_call.1} parent=5 // pred_check_branch
        %192 = sbr.rel (%p190) target = $region32
      $region31: #{tpu_custom_call.1} parent=5 // pred_region
        // Predicated region
        $region33: #{tpu_custom_call.1} parent=31 // pred_check
          %p193 = pneg %p46
        $region34: #{tpu_custom_call.1} parent=31 // pred_check_branch
          %195 = sbr.rel (%p193) target = $region36
        $region35: #{tpu_custom_call.1} parent=31 // pred_region
          %p196 = scmp.lt.s32.totalorder %s21, 1
          %s197 = scalar_select %p196, %s21, 1
          %s198 = smul.addr %s197, 4
          %s199 = scalar_lea.vmem %s0, %s198
        $region36: #{tpu_custom_call.1} parent=31 // pred_fallthru
          _
      $region32: #{tpu_custom_call.1} parent=5 // pred_fallthru
        _
      %p200 = scmp.le.s32.totalorder 1, %s14
      %p201 = scmp.lt.s32.totalorder %s14, 3
      %p202 = pnand %p200, %p201
      %p203 = pneg %p202
      // Predicated region
      $region37: #{tpu_custom_call.1} parent=5 // pred_check
        _
      $region38: #{tpu_custom_call.1} parent=5 // pred_check_branch
        %205 = sbr.rel (%p202) target = $region40
      $region39: #{tpu_custom_call.1} parent=5 // pred_region
        %s206 = ssub.s32 %s14, 1
        %p207 = scmp.lt.s32.totalorder %s23, 1
        %s208 = scalar_select %p207, %s23, 1
        %s209 = smul.addr %s208, 4
        %s210 = scalar_lea.vmem %s0, %s209
        %p211 = pneg %p52
        %p212 = pneg %p49
        %p213 = pneg %p73
        %p214 = pneg %p70
        %p215 = pneg %p94
        %p216 = pneg %p91
        %p217 = pneg %p115
        %p218 = pneg %p112
        %p219 = pneg %p136
        %p220 = pneg %p133
        %p221 = pneg %p162
        %p222 = pneg %p159
        %s223 = sand.u32 %s149, 1
        %s224 = scalar_lea.sflag [#allocation3], %s223
        %s225 = sand.u32 %s149, 1
        %s226 = smul.addr %s225, 8
        %s227 = scalar_lea.vmem [#allocation2], %s226
        %p228 = scmp.lt.s32.totalorder %s23, 1
        %s229 = scalar_select %p228, %s23, 1
        %s230 = smul.addr %s229, 4
        %s231 = scalar_lea.vmem %s0, %s230
        %p233 = scmp.eq.s32.totalorder %s24, 0
        // Predicated region
        $region41: #{tpu_custom_call.1} parent=39 // pred_check
          %p234 = pneg %p233
        $region42: #{tpu_custom_call.1} parent=39 // pred_check_branch
          %236 = sbr.rel (%p234) target = $region44
        $region43: #{tpu_custom_call.1} parent=39 // pred_region
          %v237 = vld [vmem:[%s4] sm:$0x1]
          %v239 = vlaneseq
          %v240 = vshrl.u32 %v239, 7
          %v241 = vsub.s32 0, %v240
          %v242 = vrot.slane %v237, %v241
          %vm244 = vcmask 261120
          %245 = vst.msk [vmem:[%s227] sm:$0xff] %vm244, %v242
        $region44: #{tpu_custom_call.1} parent=39 // pred_fallthru
          _
        %s246 = smul.u32 %s24, 128
        %s247 = sshra.s32 %s246, 7
        %s248 = sand.u32 %s246, 127
        %s249 = smul.addr %s247, 4
        %s250 = scalar_lea.vmem %s1, %s249
        %v251 = vld [vmem:[%s250] sm:$0xf]
        %v252 = vld [vmem:[%s250 + $0x4] sm:$0xf]
        %v253 = vld [vmem:[%s250 + $0x8] sm:$0xf]
        %v254 = vld [vmem:[%s250 + $0xc] sm:$0xf]
        %s255 = scalar_lea.vmem %s2, %s247
        %v256 = vld [vmem:[%s255] sm:$0x1]
        %s257 = sshra.s32 %s246, 3
        %s258 = sand.u32 %s246, 7
        %s259 = smul.addr %s257, 4
        %s260 = scalar_lea.vmem %s3, %s259
        %v261 = vld [vmem:[%s260] sm:$0xf]
        %v262 = vld [vmem:[%s260 + $0x4] sm:$0xf]
        %v263 = vld [vmem:[%s260 + $0x8] sm:$0xf]
        %v264 = vld [vmem:[%s260 + $0xc] sm:$0xf]
        %v265 = vld [vmem:[%s260 + $0x10] sm:$0xf]
        %v266 = vld [vmem:[%s260 + $0x14] sm:$0xf]
        %v267 = vld [vmem:[%s260 + $0x18] sm:$0xf]
        %v268 = vld [vmem:[%s260 + $0x1c] sm:$0xf]
        %v269 = vld [vmem:[%s260 + $0x20] sm:$0xf]
        %v270 = vld [vmem:[%s260 + $0x24] sm:$0xf]
        %v271 = vld [vmem:[%s260 + $0x28] sm:$0xf]
        %v272 = vld [vmem:[%s260 + $0x2c] sm:$0xf]
        %v273 = vld [vmem:[%s260 + $0x30] sm:$0xf]
        %v274 = vld [vmem:[%s260 + $0x34] sm:$0xf]
        %v275 = vld [vmem:[%s260 + $0x38] sm:$0xf]
        %v276 = vld [vmem:[%s260 + $0x3c] sm:$0xf]
        %v277 = vld [vmem:[%s231] sm:$0xf]
        %v279 = vlaneseq
        %v280 = vshrl.u32 %v279, 7
        %v281 = vsub.s32 0, %v280
        %v282 = vrot.slane %v256, %v281
        %v288 = vunpack.c.l.b16 %v251
        %v289 = vunpack.c.l.b16 %v252
        %v290 = vunpack.c.l.b16 %v253
        %v291 = vunpack.c.l.b16 %v254
        %v292 = vpack.c.b16 %v289, %v288
        %v293 = vpack.c.b16 %v291, %v290
        %vm296 = vcmask 261120
        %v298 = vsel %vm296, %v277, 0
        %300 = vmatprep.subr.bf16.mxu0 0
        %301 = vmatpush1.bf16.msra.mxu0 %v292
        %302 = vmatprep.subr.bf16.mxu0 0
        %303 = vmatpush1.bf16.msra.mxu0 %v293
        %304 = vmatprep.subr.bf16.mxu0 0
        %305 = vmatpush1.bf16.msra.mxu0 0
        %306 = vmatprep.subr.bf16.mxu0 0
        %307 = vmatpush1.bf16.msra.mxu0 0
        %308 = vmatprep.subr.bf16.mxu0 0
        %309 = vmatpush1.bf16.msra.mxu0 0
        %310 = vmatprep.subr.bf16.mxu0 0
        %311 = vmatpush1.bf16.msra.mxu0 0
        %312 = vmatprep.subr.bf16.mxu0 0
        %313 = vmatpush1.bf16.msra.mxu0 0
        %314 = vmatprep.subr.bf16.mxu0 0
        %315 = vmatpush1.bf16.msra.mxu0 0
        %316 = vmatprep.subr.bf16.mxu0 0
        %317 = vmatpush1.bf16.msra.mxu0 0
        %318 = vmatprep.subr.bf16.mxu0 0
        %319 = vmatpush1.bf16.msra.mxu0 0
        %320 = vmatprep.subr.bf16.mxu0 0
        %321 = vmatpush1.bf16.msra.mxu0 0
        %322 = vmatprep.subr.bf16.mxu0 0
        %323 = vmatpush1.bf16.msra.mxu0 0
        %324 = vmatprep.subr.bf16.mxu0 0
        %325 = vmatpush1.bf16.msra.mxu0 0
        %326 = vmatprep.subr.bf16.mxu0 0
        %327 = vmatpush1.bf16.msra.mxu0 0
        %328 = vmatprep.subr.bf16.mxu0 0
        %329 = vmatpush1.bf16.msra.mxu0 0
        %330 = vmatprep.subr.bf16.mxu0 0
        %331 = vmatpush1.bf16.msra.mxu0 0
        %332 = vmatprep.mubr.bf16.mxu0 0
        %333 = vmatmul.mubr.bf16.gmra.mrb[0].mxu0 %v298
        %v334 = vpop.f32.mrb[0].mxu0
        %v335 = vadd.f32 %v282, %v334
        %v336 = vpop.f32.mrb[0].mxu0
        %v337 = vpop.f32.mrb[0].mxu0
        %v338 = vpop.f32.mrb[0].mxu0
        %339 = vdwg.mxu0
        %v340 = vmul.f32 %v335, 0.7978846
        %v341 = vmul.f32 %v335, %v335
        %v342 = vmul.f32 %v341, 0.044715
        %v343 = vadd.f32 %v342, 1.0
        %v344 = vmul.f32 %v340, %v343
        %v345 = vmul.f32 %v335, 0.5
        %v346 = vtanh.pop %v344
        %v347 = vadd.f32 %v346, 1.0
        %v348 = vmul.f32 %v345, %v347
        %v349 = vld [vmem:[%s227] sm:$0xff]
        %v350 = vpack.c.bf16 %v348, %v348
        %v367 = vunpack.c.l.b16 %v261
        %v368 = vunpack.c.l.b16 %v262
        %v369 = vunpack.c.l.b16 %v263
        %v370 = vunpack.c.l.b16 %v264
        %v371 = vunpack.c.l.b16 %v265
        %v372 = vunpack.c.l.b16 %v266
        %v373 = vunpack.c.l.b16 %v267
        %v374 = vunpack.c.l.b16 %v268
        %v375 = vunpack.c.l.b16 %v269
        %v376 = vunpack.c.l.b16 %v270
        %v377 = vunpack.c.l.b16 %v271
        %v378 = vunpack.c.l.b16 %v272
        %v379 = vunpack.c.l.b16 %v273
        %v380 = vunpack.c.l.b16 %v274
        %v381 = vunpack.c.l.b16 %v275
        %v382 = vunpack.c.l.b16 %v276
        %v383 = vpack.c.b16 %v368, %v367
        %v384 = vpack.c.b16 %v370, %v369
        %v385 = vpack.c.b16 %v372, %v371
        %v386 = vpack.c.b16 %v374, %v373
        %v387 = vpack.c.b16 %v376, %v375
        %v388 = vpack.c.b16 %v378, %v377
        %v389 = vpack.c.b16 %v380, %v379
        %v390 = vpack.c.b16 %v382, %v381
        %399 = vmatprep.subr.bf16.mxu0 0
        %400 = vmatpush1.bf16.msra.mxu0 %v383
        %401 = vmatprep.subr.bf16.mxu0 0
        %402 = vmatpush1.bf16.msra.mxu0 %v384
        %403 = vmatprep.subr.bf16.mxu0 0
        %404 = vmatpush1.bf16.msra.mxu0 %v385
        %405 = vmatprep.subr.bf16.mxu0 0
        %406 = vmatpush1.bf16.msra.mxu0 %v386
        %407 = vmatprep.subr.bf16.mxu0 0
        %408 = vmatpush1.bf16.msra.mxu0 %v387
        %409 = vmatprep.subr.bf16.mxu0 0
        %410 = vmatpush1.bf16.msra.mxu0 %v388
        %411 = vmatprep.subr.bf16.mxu0 0
        %412 = vmatpush1.bf16.msra.mxu0 %v389
        %413 = vmatprep.subr.bf16.mxu0 0
        %414 = vmatpush1.bf16.msra.mxu0 %v390
        %415 = vmatprep.subr.bf16.mxu0 0
        %416 = vmatpush1.bf16.msra.mxu0 0
        %417 = vmatprep.subr.bf16.mxu0 0
        %418 = vmatpush1.bf16.msra.mxu0 0
        %419 = vmatprep.subr.bf16.mxu0 0
        %420 = vmatpush1.bf16.msra.mxu0 0
        %421 = vmatprep.subr.bf16.mxu0 0
        %422 = vmatpush1.bf16.msra.mxu0 0
        %423 = vmatprep.subr.bf16.mxu0 0
        %424 = vmatpush1.bf16.msra.mxu0 0
        %425 = vmatprep.subr.bf16.mxu0 0
        %426 = vmatpush1.bf16.msra.mxu0 0
        %427 = vmatprep.subr.bf16.mxu0 0
        %428 = vmatpush1.bf16.msra.mxu0 0
        %429 = vmatprep.subr.bf16.mxu0 0
        %430 = vmatpush1.bf16.msra.mxu0 0
        %431 = vmatprep.mubr.bf16.mxu0 0
        %432 = vmatmul.mubr.bf16.gmra.mrb[0].mxu0 %v350
        %v433 = vpop.f32.mrb[0].mxu0
        %v434 = vadd.f32 0.0, %v433
        %v435 = vpop.f32.mrb[0].mxu0
        %v436 = vpop.f32.mrb[0].mxu0
        %v437 = vpop.f32.mrb[0].mxu0
        %438 = vdwg.mxu0
        %v439 = vadd.f32 %v349, %v434
        %440 = vst.msk [vmem:[%s227] sm:$0xff] %vm296, %v439
        %s441 = sand.u32 %s149, 1
        %s442 = scalar_lea.sflag [#allocation3], %s441
        %s443 = sand.u32 %s149, 1
        %s444 = smul.addr %s443, 8
        %s445 = scalar_lea.vmem [#allocation2], %s444
        // Predicated region
        $region45: #{tpu_custom_call.1} parent=39 // pred_check
          %p446 = pneg %p159
        $region46: #{tpu_custom_call.1} parent=39 // pred_check_branch
          %448 = sbr.rel (%p446) target = $region48
        $region47: #{tpu_custom_call.1} parent=39 // pred_region
          %s450 = ssub.s32 128, 128
          %451 = vsyncadd %s442, %s450
          %s452 = smul.addr %s23, 128
          %s453 = scalar_lea.hbm %s5, %s452
          %s455 = sshll.u32 %s445, 4
          %s456 = int_to_ptr.vmem [resolvable:$true] %s455
          %458 = dma.vmem_to_hbm [thread:$0]  %s456, 128, %s453, %s442
        $region48: #{tpu_custom_call.1} parent=39 // pred_fallthru
          _
      $region40: #{tpu_custom_call.1} parent=5 // pred_fallthru
        _
      %p459 = scmp.le.s32.totalorder 2, %s14
      // Predicated region
      $region49: #{tpu_custom_call.1} parent=5 // pred_check
        %p460 = pneg %p459
      $region50: #{tpu_custom_call.1} parent=5 // pred_check_branch
        %462 = sbr.rel (%p460) target = $region52
      $region51: #{tpu_custom_call.1} parent=5 // pred_region
        %s463 = ssub.s32 %s14, 2
        // Predicated region
        $region53: #{tpu_custom_call.1} parent=51 // pred_check
          %p464 = pneg %p165
        $region54: #{tpu_custom_call.1} parent=51 // pred_check_branch
          %466 = sbr.rel (%p464) target = $region56
        $region55: #{tpu_custom_call.1} parent=51 // pred_region
          %s467 = sand.u32 %s150, 1
          %s468 = scalar_lea.sflag [#allocation3], %s467
          %s469 = sand.u32 %s150, 1
          %s470 = smul.addr %s469, 8
          %s471 = scalar_lea.vmem [#allocation2], %s470
          %472 = dma.done %s468, 128
        $region56: #{tpu_custom_call.1} parent=51 // pred_fallthru
          _
      $region52: #{tpu_custom_call.1} parent=5 // pred_fallthru
        _
    $region6: #{tpu_custom_call.1} parent=1 // loop_footer
      %s18 = sadd.s32 1, %s14
    $region7: #{tpu_custom_call.1} parent=1 // loop_footer_branch
      %13 = sbr.rel target = $region3
    $region8: #{tpu_custom_call.1} parent=1 // loop_exit
      _
    %473 = vsyncpa [#allocation3], 1
    %s474 = scalar_lea.sflag [#allocation3], 1
    %475 = vsyncpa %s474, 1

</llo_original>
